<compile_context>
chip_gen: v7x
topology: tpu7x:2x2x1
jax: 0.10.0
libtpu: 0.0.40
codegen_flags: <defaults>
</compile_context>

<pallas_src>
import jax
import jax.numpy as jnp
from jax.experimental import pallas as pl
from jax.experimental.pallas import tpu as pltpu

EPS = 1e-5


def _vmem_limit_bytes():
    """Generation-aware scoped-VMEM budget (v7x: ~48 MiB, v5e/v6e: ~96 MiB)."""
    cap = 128 * 1024 * 1024
    try:
        info = pltpu.get_tpu_info()
        cap = int(getattr(info, "vmem_capacity_bytes", cap) or cap)
    except Exception:
        pass
    return int(min(cap * 3 // 4, 96 * 1024 * 1024))


def _pick_lane_tile(hw, c, in_bytes, vmem_limit):
    """Largest lane tile (multiple of 128, <= hw) whose per-pass, double-buffered
    working set stays at ~60% of the scoped VMEM limit."""
    if hw < 128:
        return hw  # full-extent block is always legal
    # pass 2: in + out, double-buffered            -> 4 * c * T * in_bytes
    # pass 1: in double-buffered + f32 temporaries -> c * T * (2*in_bytes + 8)
    per_lane = c * max(4 * in_bytes, 2 * in_bytes + 8)
    budget = (vmem_limit * 3) // 5
    t = min(budget // max(per_lane, 1), hw)
    t = (t // 128) * 128
    return max(t, 128)


def batch_norm_2d(x_nchw, gamma, beta, eps=EPS):
    """Training-mode BatchNorm2d forward. x_nchw: (N, C, H, W); gamma/beta: (C,)."""
    N, C, H, W = x_nchw.shape
    hw = H * W
    nhw = float(N * hw)
    in_bytes = jnp.dtype(x_nchw.dtype).itemsize
    vmem_limit = _vmem_limit_bytes()
    T = _pick_lane_tile(hw, C, in_bytes, vmem_limit)
    n_t = pl.cdiv(hw, T)
    needs_mask = (hw % T) != 0

    x3 = x_nchw.reshape(N, C, hw)  # contiguous merge -> no HBM copy
    g2 = gamma.astype(jnp.float32).reshape(C, 1)
    b2 = beta.astype(jnp.float32).reshape(C, 1)

    # ---- pass 1: per-(n, channel) shifted sum / sum-of-squares -------------
    def stats_kernel(x_ref, s1_ref, s2_ref, pilot_ref):
        t = pl.program_id(1)

        @pl.when(t == 0)
        def _():
            pilot_ref[...] = x_ref[:, :, 0:1].astype(jnp.float32)
            s1_ref[...] = jnp.zeros_like(s1_ref)
            s2_ref[...] = jnp.zeros_like(s2_ref)

        d = x_ref[...].astype(jnp.float32) - pilot_ref[...]      # (1, C, T)
        if needs_mask:
            lane = jax.lax.broadcasted_iota(jnp.int32, (1, C, T), 2)
            d = jnp.where(t * T + lane < hw, d, 0.0)
        s1_ref[...] += jnp.sum(d, axis=-1, keepdims=True)
        s2_ref[...] += jnp.sum(d * d, axis=-1, keepdims=True)

    s1, s2, pilot = pl.pallas_call(
        stats_kernel,
        out_shape=(
            jax.ShapeDtypeStruct((N, C, 1), jnp.float32),
            jax.ShapeDtypeStruct((N, C, 1), jnp.float32),
            jax.ShapeDtypeStruct((N, C, 1), jnp.float32),
        ),
        grid=(N, n_t),
        in_specs=[pl.BlockSpec((1, C, T), lambda n, t: (n, 0, t))],
        out_specs=(
            pl.BlockSpec((1, C, 1), lambda n, t: (n, 0, 0)),
            pl.BlockSpec((1, C, 1), lambda n, t: (n, 0, 0)),
            pl.BlockSpec((1, C, 1), lambda n, t: (n, 0, 0)),
        ),
        compiler_params=pltpu.CompilerParams(
            dimension_semantics=("parallel", "arbitrary"),
            vmem_limit_bytes=vmem_limit,
        ),
    )(x3)

    # ---- pass 2: fold stats -> (a, b) in-kernel, then y = x * a + b --------
    def norm_kernel(x_ref, pilot_ref, s1_ref, s2_ref, g_ref, bt_ref, o_ref):
        pilot = pilot_ref[...]                                    # (N, C, 1)
        s1v = s1_ref[...]
        s2v = s2_ref[...]
        total = jnp.sum(float(hw) * pilot + s1v, axis=0)          # (C, 1)
        mean = total * (1.0 / nhw)
        dd = mean[None] - pilot                                   # (N, C, 1)
        varnum = jnp.sum(s2v - 2.0 * dd * s1v + float(hw) * dd * dd, axis=0)
        var = jnp.maximum(varnum * (1.0 / nhw), 0.0)              # biased var
        inv_std = jax.lax.rsqrt(var + eps)                        # (C, 1)
        a = g_ref[...] * inv_std                                  # (C, 1)
        b = bt_ref[...] - mean * a                                # (C, 1)
        x = x_ref[...].astype(jnp.float32)                        # (1, C, T)
        o_ref[...] = (x * a[None] + b[None]).astype(o_ref.dtype)

    out3 = pl.pallas_call(
        norm_kernel,
        out_shape=jax.ShapeDtypeStruct((N, C, hw), x_nchw.dtype),
        grid=(N, n_t),
        in_specs=[
            pl.BlockSpec((1, C, T), lambda n, t: (n, 0, t)),
            pl.BlockSpec((N, C, 1), lambda n, t: (0, 0, 0)),
            pl.BlockSpec((N, C, 1), lambda n, t: (0, 0, 0)),
            pl.BlockSpec((N, C, 1), lambda n, t: (0, 0, 0)),
            pl.BlockSpec((C, 1), lambda n, t: (0, 0)),
            pl.BlockSpec((C, 1), lambda n, t: (0, 0)),
        ],
        out_specs=pl.BlockSpec((1, C, T), lambda n, t: (n, 0, t)),
        compiler_params=pltpu.CompilerParams(
            dimension_semantics=("parallel", "parallel"),
            vmem_limit_bytes=vmem_limit,
        ),
    )(x3, pilot, s1, s2, g2, b2)

    return out3.reshape(N, C, H, W)  # contiguous split -> no HBM copy


if __name__ == "__main__":
    key = jax.random.PRNGKey(0)
    N, C, H, W = 2, 4, 16, 16

    kx, ky = jax.random.split(key)
    x = jax.random.normal(kx, (N, C, H, W), dtype=jnp.float32)
    y_ignored = jax.random.normal(ky, (N, 10), dtype=jnp.float32)  # ignored, as in the module

    # nn.BatchNorm2d default parameter init: weight=1, bias=0.
    gamma = jnp.ones((C,), dtype=jnp.float32)
    beta = jnp.zeros((C,), dtype=jnp.float32)

    out = batch_norm_2d(x, gamma, beta)
    out = jax.block_until_ready(out)

    # Pure-JAX reference (training-mode batch norm, biased variance).
    mean = jnp.mean(x, axis=(0, 2, 3), keepdims=True)
    var = jnp.mean((x - mean) ** 2, axis=(0, 2, 3), keepdims=True)
    ref = (x - mean) / jnp.sqrt(var + EPS) * gamma.reshape(1, C, 1, 1) + beta.reshape(1, C, 1, 1)
    assert out.shape == (N, C, H, W)
    assert jnp.max(jnp.abs(out - ref)) < 1e-4

    print("KERNEL_OK")
</pallas_src>

<mosaic_0001>
module attributes {stable_mosaic.version = 11 : i64} {
  func.func @stats_kernel(%arg0: i32, %arg1: i32, %arg2: memref<1x4x256xf32, #tpu.memory_space<vmem>>, %arg3: memref<1x4x1xf32, #tpu.memory_space<vmem>>, %arg4: memref<1x4x1xf32, #tpu.memory_space<vmem>>, %arg5: memref<1x4x1xf32, #tpu.memory_space<vmem>>) attributes {dimension_semantics = [#tpu.dimension_semantics<parallel>, #tpu.dimension_semantics<arbitrary>], iteration_bounds = array<i64: 2, 1>, scalar_prefetch = 0 : i64, scratch_operands = 0 : i64, tpu.core_type = #tpu.core_type<tc>, window_params = [{transform_indices = @transform_0, window_bounds = array<i64: 1, 4, 256>}, {transform_indices = @transform_1, window_bounds = array<i64: 1, 4, 1>}, {transform_indices = @transform_2, window_bounds = array<i64: 1, 4, 1>}, {transform_indices = @transform_3, window_bounds = array<i64: 1, 4, 1>}]} {
    %c0_i32 = arith.constant 0 : i32
    %0 = arith.cmpi eq, %arg1, %c0_i32 : i32
    %1 = arith.extui %0 : i1 to i32
    %c0_i32_0 = arith.constant 0 : i32
    %2 = arith.cmpi ne, %1, %c0_i32_0 : i32
    scf.if %2 {
      %c0_19 = arith.constant 0 : index
      %c0_20 = arith.constant 0 : index
      %c0_21 = arith.constant 0 : index
      %18 = vector.load %arg2[%c0_19, %c0_20, %c0_21] : memref<1x4x256xf32, #tpu.memory_space<vmem>>, vector<1x4x1xf32>
      %c0_22 = arith.constant 0 : index
      %c0_23 = arith.constant 0 : index
      %c0_24 = arith.constant 0 : index
      %19 = vector.load %arg5[%c0_22, %c0_23, %c0_24] : memref<1x4x1xf32, #tpu.memory_space<vmem>>, vector<1x4x1xf32>
      tpu.vector_store %arg5[%c0_22, %c0_23, %c0_24], %18 {strides = array<i32>} : memref<1x4x1xf32, #tpu.memory_space<vmem>>, vector<1x4x1xf32>,
      %cst_25 = arith.constant 0.000000e+00 : f32
      %20 = vector.broadcast %cst_25 : f32 to vector<1x4x1xf32>
      %c0_26 = arith.constant 0 : index
      %c0_27 = arith.constant 0 : index
      %c0_28 = arith.constant 0 : index
      %21 = vector.load %arg3[%c0_26, %c0_27, %c0_28] : memref<1x4x1xf32, #tpu.memory_space<vmem>>, vector<1x4x1xf32>
      tpu.vector_store %arg3[%c0_26, %c0_27, %c0_28], %20 {strides = array<i32>} : memref<1x4x1xf32, #tpu.memory_space<vmem>>, vector<1x4x1xf32>,
      %cst_29 = arith.constant 0.000000e+00 : f32
      %22 = vector.broadcast %cst_29 : f32 to vector<1x4x1xf32>
      %c0_30 = arith.constant 0 : index
      %c0_31 = arith.constant 0 : index
      %c0_32 = arith.constant 0 : index
      %23 = vector.load %arg4[%c0_30, %c0_31, %c0_32] : memref<1x4x1xf32, #tpu.memory_space<vmem>>, vector<1x4x1xf32>
      tpu.vector_store %arg4[%c0_30, %c0_31, %c0_32], %22 {strides = array<i32>} : memref<1x4x1xf32, #tpu.memory_space<vmem>>, vector<1x4x1xf32>,
    } else {
    }
    %c0 = arith.constant 0 : index
    %c0_1 = arith.constant 0 : index
    %c0_2 = arith.constant 0 : index
    %3 = vector.load %arg2[%c0, %c0_1, %c0_2] : memref<1x4x256xf32, #tpu.memory_space<vmem>>, vector<1x4x256xf32>
    %c0_3 = arith.constant 0 : index
    %c0_4 = arith.constant 0 : index
    %c0_5 = arith.constant 0 : index
    %4 = vector.load %arg5[%c0_3, %c0_4, %c0_5] : memref<1x4x1xf32, #tpu.memory_space<vmem>>, vector<1x4x1xf32>
    %5 = vector.broadcast %4 : vector<1x4x1xf32> to vector<1x4x256xf32>
    %6 = arith.subf %3, %5 : vector<1x4x256xf32>
    %c0_6 = arith.constant 0 : index
    %c0_7 = arith.constant 0 : index
    %c0_8 = arith.constant 0 : index
    %7 = vector.load %arg3[%c0_6, %c0_7, %c0_8] : memref<1x4x1xf32, #tpu.memory_space<vmem>>, vector<1x4x1xf32>
    %cst = arith.constant dense<0.000000e+00> : vector<1x4xf32>
    %8 = vector.multi_reduction <add>, %6, %cst [2] : vector<1x4x256xf32> to vector<1x4xf32>
    %9 = vector.shape_cast %8 : vector<1x4xf32> to vector<1x4x1xf32>
    %10 = arith.addf %7, %9 : vector<1x4x1xf32>
    %c0_9 = arith.constant 0 : index
    %c0_10 = arith.constant 0 : index
    %c0_11 = arith.constant 0 : index
    %11 = vector.load %arg3[%c0_9, %c0_10, %c0_11] : memref<1x4x1xf32, #tpu.memory_space<vmem>>, vector<1x4x1xf32>
    tpu.vector_store %arg3[%c0_9, %c0_10, %c0_11], %10 {strides = array<i32>} : memref<1x4x1xf32, #tpu.memory_space<vmem>>, vector<1x4x1xf32>,
    %c0_12 = arith.constant 0 : index
    %c0_13 = arith.constant 0 : index
    %c0_14 = arith.constant 0 : index
    %12 = vector.load %arg4[%c0_12, %c0_13, %c0_14] : memref<1x4x1xf32, #tpu.memory_space<vmem>>, vector<1x4x1xf32>
    %13 = arith.mulf %6, %6 : vector<1x4x256xf32>
    %cst_15 = arith.constant dense<0.000000e+00> : vector<1x4xf32>
    %14 = vector.multi_reduction <add>, %13, %cst_15 [2] : vector<1x4x256xf32> to vector<1x4xf32>
    %15 = vector.shape_cast %14 : vector<1x4xf32> to vector<1x4x1xf32>
    %16 = arith.addf %12, %15 : vector<1x4x1xf32>
    %c0_16 = arith.constant 0 : index
    %c0_17 = arith.constant 0 : index
    %c0_18 = arith.constant 0 : index
    %17 = vector.load %arg4[%c0_16, %c0_17, %c0_18] : memref<1x4x1xf32, #tpu.memory_space<vmem>>, vector<1x4x1xf32>
    tpu.vector_store %arg4[%c0_16, %c0_17, %c0_18], %16 {strides = array<i32>} : memref<1x4x1xf32, #tpu.memory_space<vmem>>, vector<1x4x1xf32>,
    return
  }
  func.func @transform_0(%arg0: i32, %arg1: i32) -> (i32, i32, i32) {
    %c0_i32 = arith.constant 0 : i32
    %c0_i32_0 = arith.constant 0 : i32
    return %arg0, %c0_i32, %arg1 : i32, i32, i32
  }
  func.func @transform_1(%arg0: i32, %arg1: i32) -> (i32, i32, i32) {
    %c0_i32 = arith.constant 0 : i32
    %c0_i32_0 = arith.constant 0 : i32
    %c0_i32_1 = arith.constant 0 : i32
    return %arg0, %c0_i32, %c0_i32_0 : i32, i32, i32
  }
  func.func @transform_2(%arg0: i32, %arg1: i32) -> (i32, i32, i32) {
    %c0_i32 = arith.constant 0 : i32
    %c0_i32_0 = arith.constant 0 : i32
    %c0_i32_1 = arith.constant 0 : i32
    return %arg0, %c0_i32, %c0_i32_0 : i32, i32, i32
  }
  func.func @transform_3(%arg0: i32, %arg1: i32) -> (i32, i32, i32) {
    %c0_i32 = arith.constant 0 : i32
    %c0_i32_0 = arith.constant 0 : i32
    %c0_i32_1 = arith.constant 0 : i32
    return %arg0, %c0_i32, %c0_i32_0 : i32, i32, i32
  }
}

</mosaic_0001>

<llo_original>
// kernel: tpu_custom_call.1
$region0: #{tpu_custom_call.1}
  #allocation0 [shape = 'u32[]', space=smem, size = 0x4, offset = 0x4, fixed_abs, tag = 'smem constant byte address 0x4 - core index']
  #allocation1 [shape = 'u32[144,128]{1,0:T(1,128)}', space=vmem, size = 0x12000, scoped, tag = 'internal scratch']
  %s0 = inlined_call_operand.hbm [shape: f32[2,4,256], index: 0, kind: input, shape index: {}]
  %s1 = inlined_call_operand.hbm [shape: f32[2,4,1], index: 1, kind: output, shape index: {0}]
  %s2 = inlined_call_operand.hbm [shape: f32[2,4,1], index: 2, kind: output, shape index: {1}]
  %s3 = inlined_call_operand.hbm [shape: f32[2,4,1], index: 3, kind: output, shape index: {2}]
  %4 = xla_tuple %s1, %s2, %s3
  %s5 = sld [smem:[#allocation0]]
  $region61: #{tpu_custom_call.1} parent=0
    _
  %s7 = ssub.s32 1, %s5
  %s8 = scalar_select 0, %s7, %s5
  $region1: #{tpu_custom_call.1} parent=0
    #allocation2 [shape = 'u8[8192]{0}', space=vmem, size = 0x2000, scoped, tag = 'input window, operand 0']
    #allocation3 [shape = 's32[2]{0}', space=sflag, size = 0x8, scoped, tag = 'scoped memory for tpu_custom_call.1']
    #allocation4 [shape = 's32[2]{0}', space=sflag, size = 0x8, scoped, tag = 'scoped memory for tpu_custom_call.1']
    #allocation5 [shape = 'u8[4096]{0}', space=vmem, size = 0x1000, scoped, tag = 'output window, operand 0']
    #allocation6 [shape = 'u8[4096]{0}', space=vmem, size = 0x1000, scoped, tag = 'output window, operand 1']
    #allocation7 [shape = 's32[2]{0}', space=sflag, size = 0x8, scoped, tag = 'scoped memory for tpu_custom_call.1']
    #allocation8 [shape = 'u8[4096]{0}', space=vmem, size = 0x1000, scoped, tag = 'output window, operand 2']
    %9 = vsyncpa [#allocation3], 0
    %s10 = scalar_lea.sflag [#allocation3], 1
    %11 = vsyncpa %s10, 0
    %12 = vsyncpa [#allocation4], 0
    %s13 = scalar_lea.sflag [#allocation4], 1
    %14 = vsyncpa %s13, 0
    %15 = vsyncpa [#allocation7], 0
    %s16 = scalar_lea.sflag [#allocation7], 1
    %17 = vsyncpa %s16, 0
    loop: start=0, step=1, limit=4
    $region2: #{tpu_custom_call.1} parent=1 // loop_pre_header
      _
    $region3: #{tpu_custom_call.1} parent=1 // loop_header
      %s19 = sphi 0, %s23
      %p20 = scmp.ge.s32.totalorder %s19, 4
      %s26 = sphi 0, %s38
      %s27 = sphi 0, %s34
      %s28 = sphi 0, %s26
      %s29 = sphi 0, %s27
      %s30 = sphi 0, %s28
      %s31 = sphi 0, %s29
      %s43 = sphi 0, %s45
      %s46 = sphi 0, %s43
      %s47 = sphi 0, %s46
      %s63 = sphi 0, %s47
      %s69 = sphi 0, %s71
      %s72 = sphi 0, %s69
      %s73 = sphi 0, %s72
      %s89 = sphi 0, %s73
      %s95 = sphi 0, %s97
      %s98 = sphi 0, %s95
      %s99 = sphi 0, %s98
      %s115 = sphi 0, %s99
      %s121 = sphi 0, %s123
      %s124 = sphi 0, %s121
      %s125 = sphi 0, %s124
      %s141 = sphi 0, %s125
    $region4: #{tpu_custom_call.1} parent=1 // loop_header_branch
      %22 = sbr.rel (%p20) target = $region8
    $region5: #{tpu_custom_call.1} parent=1 // loop_body
      %s24 = ssub.s32 %s19, 1
      %s25 = ssub.s32 %s19, 2
      %s32 = sadd.s32 1, %s27
      %p33 = scmp.ge.s32.totalorder %s32, 1
      %s34 = scalar_select %p33, 0, %s32
      %s35 = sadd.s32 1, %s26
      %s36 = scalar_select %p33, %s35, %s26
      %p37 = scmp.ge.s32.totalorder %s36, 2
      %s38 = scalar_select %p37, 0, %s36
      %s39 = ssub.s32 %s26, %s38
      %s40 = ssub.s32 %s27, %s34
      %s41 = sor.u32 %s39, %s40
      %p42 = scmp.eq.s32.totalorder %s41, 0
      %s44 = sadd.s32 %s43, 1
      %s45 = scalar_select %p42, %s43, %s44
      %p48 = pneg %p42
      %p49 = scmp.eq.s32.totalorder %s19, 1
      %p50 = por %p48, %p49
      %p51 = scmp.ne.s32.totalorder %s43, %s46
      %p52 = scmp.eq.s32.totalorder %s19, 0
      %p53 = por %p51, %p52
      %p54 = scmp.ne.s32.totalorder %s43, %s46
      %p55 = scmp.eq.s32.totalorder %s24, 1
      %p56 = por %p54, %p55
      %p57 = scmp.ne.s32.totalorder %s46, %s47
      %p58 = scmp.eq.s32.totalorder %s24, 0
      %p59 = por %p57, %p58
      %p60 = scmp.ne.s32.totalorder %s46, %s47
      %p61 = scmp.eq.s32.totalorder %s25, 1
      %p62 = por %p60, %p61
      %p64 = scmp.ne.s32.totalorder %s47, %s63
      %p65 = scmp.eq.s32.totalorder %s25, 0
      %p66 = por %p64, %p65
      %s67 = ssub.s32 %s26, %s38
      %p68 = scmp.eq.s32.totalorder %s67, 0
      %s70 = sadd.s32 %s69, 1
      %s71 = scalar_select %p68, %s69, %s70
      %p74 = pneg %p68
      %p75 = scmp.eq.s32.totalorder %s19, 1
      %p76 = por %p74, %p75
      %p77 = scmp.ne.s32.totalorder %s69, %s72
      %p78 = scmp.eq.s32.totalorder %s19, 0
      %p79 = por %p77, %p78
      %p80 = scmp.ne.s32.totalorder %s69, %s72
      %p81 = scmp.eq.s32.totalorder %s24, 1
      %p82 = por %p80, %p81
      %p83 = scmp.ne.s32.totalorder %s72, %s73
      %p84 = scmp.eq.s32.totalorder %s24, 0
      %p85 = por %p83, %p84
      %p86 = scmp.ne.s32.totalorder %s72, %s73
      %p87 = scmp.eq.s32.totalorder %s25, 1
      %p88 = por %p86, %p87
      %p90 = scmp.ne.s32.totalorder %s73, %s89
      %p91 = scmp.eq.s32.totalorder %s25, 0
      %p92 = por %p90, %p91
      %s93 = ssub.s32 %s26, %s38
      %p94 = scmp.eq.s32.totalorder %s93, 0
      %s96 = sadd.s32 %s95, 1
      %s97 = scalar_select %p94, %s95, %s96
      %p100 = pneg %p94
      %p101 = scmp.eq.s32.totalorder %s19, 1
      %p102 = por %p100, %p101
      %p103 = scmp.ne.s32.totalorder %s95, %s98
      %p104 = scmp.eq.s32.totalorder %s19, 0
      %p105 = por %p103, %p104
      %p106 = scmp.ne.s32.totalorder %s95, %s98
      %p107 = scmp.eq.s32.totalorder %s24, 1
      %p108 = por %p106, %p107
      %p109 = scmp.ne.s32.totalorder %s98, %s99
      %p110 = scmp.eq.s32.totalorder %s24, 0
      %p111 = por %p109, %p110
      %p112 = scmp.ne.s32.totalorder %s98, %s99
      %p113 = scmp.eq.s32.totalorder %s25, 1
      %p114 = por %p112, %p113
      %p116 = scmp.ne.s32.totalorder %s99, %s115
      %p117 = scmp.eq.s32.totalorder %s25, 0
      %p118 = por %p116, %p117
      %s119 = ssub.s32 %s26, %s38
      %p120 = scmp.eq.s32.totalorder %s119, 0
      %s122 = sadd.s32 %s121, 1
      %s123 = scalar_select %p120, %s121, %s122
      %p126 = pneg %p120
      %p127 = scmp.eq.s32.totalorder %s19, 1
      %p128 = por %p126, %p127
      %p129 = scmp.ne.s32.totalorder %s121, %s124
      %p130 = scmp.eq.s32.totalorder %s19, 0
      %p131 = por %p129, %p130
      %p132 = scmp.ne.s32.totalorder %s121, %s124
      %p133 = scmp.eq.s32.totalorder %s24, 1
      %p134 = por %p132, %p133
      %p135 = scmp.ne.s32.totalorder %s124, %s125
      %p136 = scmp.eq.s32.totalorder %s24, 0
      %p137 = por %p135, %p136
      %p138 = scmp.ne.s32.totalorder %s124, %s125
      %p139 = scmp.eq.s32.totalorder %s25, 1
      %p140 = por %p138, %p139
      %p142 = scmp.ne.s32.totalorder %s125, %s141
      %p143 = scmp.eq.s32.totalorder %s25, 0
      %p144 = por %p142, %p143
      %p145 = scmp.le.s32.totalorder 1, %s19
      %p146 = scmp.lt.s32.totalorder %s19, 3
      %p147 = pnand %p145, %p146
      %p148 = pneg %p147
      // Predicated region
      $region9: #{tpu_custom_call.1} parent=5 // pred_check
        _
      $region10: #{tpu_custom_call.1} parent=5 // pred_check_branch
        %150 = sbr.rel (%p147) target = $region12
      $region11: #{tpu_custom_call.1} parent=5 // pred_region
        %s151 = ssub.s32 %s19, 1
      $region12: #{tpu_custom_call.1} parent=5 // pred_fallthru
        _
      %p152 = scmp.lt.s32.totalorder %s19, 2
      // Predicated region
      $region13: #{tpu_custom_call.1} parent=5 // pred_check
        %p153 = pneg %p152
      $region14: #{tpu_custom_call.1} parent=5 // pred_check_branch
        %155 = sbr.rel (%p153) target = $region16
      $region15: #{tpu_custom_call.1} parent=5 // pred_region
        // Predicated region
        $region17: #{tpu_custom_call.1} parent=15 // pred_check
          %p156 = pneg %p53
        $region18: #{tpu_custom_call.1} parent=15 // pred_check_branch
          %158 = sbr.rel (%p156) target = $region20
        $region19: #{tpu_custom_call.1} parent=15 // pred_region
          %s159 = sand.u32 %s43, 1
          %s160 = scalar_lea.sflag [#allocation3], %s159
          %s161 = sand.u32 %s43, 1
          %s162 = smul.addr %s161, 8
          %s163 = scalar_lea.vmem [#allocation2], %s162
          %s164 = smul.u32 2, %s27
          %s166 = ssub.s32 128, 128
          %167 = vsyncadd %s160, %s166
          %s168 = smul.addr %s26, 2
          %s169 = sadd.s32 %s164, %s168
          %s170 = smul.addr %s169, 64
          %s171 = scalar_lea.hbm %s0, %s170
          %s173 = sshll.u32 %s163, 4
          %s174 = int_to_ptr.vmem [resolvable:$true] %s173
          %176 = dma.hbm_to_vmem [thread:$0]  %s171, 128, %s174, %s160
        $region20: #{tpu_custom_call.1} parent=15 // pred_fallthru
          _
      $region16: #{tpu_custom_call.1} parent=5 // pred_fallthru
        _
      %p177 = scmp.le.s32.totalorder 1, %s19
      %p178 = scmp.lt.s32.totalorder %s19, 3
      %p179 = pnand %p177, %p178
      %p180 = pneg %p179
      // Predicated region
      $region21: #{tpu_custom_call.1} parent=5 // pred_check
        _
      $region22: #{tpu_custom_call.1} parent=5 // pred_check_branch
        %182 = sbr.rel (%p179) target = $region24
      $region23: #{tpu_custom_call.1} parent=5 // pred_region
        %s183 = ssub.s32 %s19, 1
        %s184 = sand.u32 %s46, 1
        %s185 = scalar_lea.sflag [#allocation3], %s184
        %s186 = sand.u32 %s46, 1
        %s187 = smul.addr %s186, 8
        %s188 = scalar_lea.vmem [#allocation2], %s187
        // Predicated region
        $region25: #{tpu_custom_call.1} parent=23 // pred_check
          %p189 = pneg %p59
        $region26: #{tpu_custom_call.1} parent=23 // pred_check_branch
          %191 = sbr.rel (%p189) target = $region28
        $region27: #{tpu_custom_call.1} parent=23 // pred_region
          %192 = dma.done %s185, 128
        $region28: #{tpu_custom_call.1} parent=23 // pred_fallthru
          _
        %s193 = sand.u32 %s46, 1
        %s194 = scalar_lea.sflag [#allocation3], %s193
        %s195 = sand.u32 %s46, 1
        %s196 = smul.addr %s195, 8
        %s197 = scalar_lea.vmem [#allocation2], %s196
        %p198 = pneg %p59
        %p199 = pneg %p56
        %p200 = pneg %p85
        %p201 = pneg %p82
        %s202 = sand.u32 %s72, 1
        %s203 = scalar_lea.sflag [#allocation4], %s202
        %s204 = sand.u32 %s72, 1
        %s205 = smul.addr %s204, 4
        %s206 = scalar_lea.vmem [#allocation5], %s205
        %p207 = pneg %p111
        %p208 = pneg %p108
        %s209 = sand.u32 %s24, 1
        %s210 = scalar_lea.sflag [#allocation7], %s209
        %s211 = sand.u32 %s98, 1
        %s212 = smul.addr %s211, 4
        %s213 = scalar_lea.vmem [#allocation6], %s212
        %p214 = pneg %p137
        %p215 = pneg %p134
        %s216 = sand.u32 %s24, 1
        %s217 = scalar_lea.sflag [#allocation7], %s216
        %s218 = sand.u32 %s124, 1
        %s219 = smul.addr %s218, 4
        %s220 = scalar_lea.vmem [#allocation8], %s219
        %s221 = smul.u32 2, %s29
        %p222 = scmp.eq.s32.totalorder %s29, 0
        // Predicated region
        $region29: #{tpu_custom_call.1} parent=23 // pred_check
          %p223 = pneg %p222
        $region30: #{tpu_custom_call.1} parent=23 // pred_check_branch
          %225 = sbr.rel (%p223) target = $region32
        $region31: #{tpu_custom_call.1} parent=23 // pred_region
          %v226 = vld [vmem:[%s188] sm:$0xf]
          %vm227 = vcmask 3072
          %228 = vst.msk [vmem:[%s220] sm:$0xf] %vm227, %v226
          %229 = vst.msk [vmem:[%s206] sm:$0xf] %vm227, 0.0
          %230 = vst.msk [vmem:[%s213] sm:$0xf] %vm227, 0.0
        $region32: #{tpu_custom_call.1} parent=23 // pred_fallthru
          _
        %v231 = vld [vmem:[%s188] sm:$0xff]
        %v232 = vld [vmem:[%s220] sm:$0xf]
        %234 = vset.pattern.permute.xlu0 0
        %235 = vperm.xlu0 %234, %v232
        %v236 = vpop.permute.xlu0 %235
        %v238 = vunpack.c.l.s4 839922192
        %v239 = vunpack.c.0.s8 %v238
        %v240 = vlaneseq
        %v241 = vshrl.u32 %v240, 7
        %v242 = vsub.s32 %v239, %v241
        %v243 = vrot.slane %v236, %v242
        %v245 = vsub.f32 %v231, %v243
        %v246 = vld [vmem:[%s206] sm:$0xf]
        %v248 = vcombine.high %v245, %v245
        %vm250 = vcmask 1043456
        %v251 = vsel %vm250, %v245, 0.0
        %v252 = vsel %vm250, %v248, 0.0
        %v253 = vadd.f32 %v251, %v252
        %254 = vadd.xlane.f32.xlu0 %v253
        %v255 = vpop.xlane.xlu0 %254
        %v256 = vadd.f32 %v246, %v255
        %vm257 = vcmask 3072
        %258 = vst.msk [vmem:[%s206] sm:$0xf] %vm257, %v256
        %v259 = vld [vmem:[%s213] sm:$0xf]
        %v260 = vmul.f32 %v245, %v245
        %v262 = vcombine.high %v260, %v260
        %v264 = vsel %vm250, %v260, 0.0
        %v265 = vsel %vm250, %v262, 0.0
        %v266 = vadd.f32 %v264, %v265
        %267 = vadd.xlane.f32.xlu0 %v266
        %v268 = vpop.xlane.xlu0 %267
        %v269 = vadd.f32 %v259, %v268
        %270 = vst.msk [vmem:[%s213] sm:$0xf] %vm257, %v269
        %s271 = sand.u32 %s72, 1
        %s272 = scalar_lea.sflag [#allocation4], %s271
        %s273 = sand.u32 %s72, 1
        %s274 = smul.addr %s273, 4
        %s275 = scalar_lea.vmem [#allocation5], %s274
        %s276 = sand.u32 %s24, 1
        %s277 = scalar_lea.sflag [#allocation7], %s276
        %s278 = sand.u32 %s98, 1
        %s279 = smul.addr %s278, 4
        %s280 = scalar_lea.vmem [#allocation6], %s279
        %s281 = sand.u32 %s24, 1
        %s282 = scalar_lea.sflag [#allocation7], %s281
        %s283 = sand.u32 %s124, 1
        %s284 = smul.addr %s283, 4
        %s285 = scalar_lea.vmem [#allocation8], %s284
        // Predicated region
        $region33: #{tpu_custom_call.1} parent=23 // pred_check
          %p286 = pneg %p82
        $region34: #{tpu_custom_call.1} parent=23 // pred_check_branch
          %288 = sbr.rel (%p286) target = $region36
        $region35: #{tpu_custom_call.1} parent=23 // pred_region
          %s290 = ssub.s32 64, 64
          %291 = vsyncadd %s272, %s290
          %s292 = smul.addr %s28, 64
          %s293 = scalar_lea.hbm %s1, %s292
          %s295 = sshll.u32 %s275, 4
          %s296 = int_to_ptr.vmem [resolvable:$true] %s295
          %298 = dma.vmem_to_hbm [thread:$0]  %s296, 64, %s293, %s272
        $region36: #{tpu_custom_call.1} parent=23 // pred_fallthru
          _
        // Predicated region
        $region37: #{tpu_custom_call.1} parent=23 // pred_check
          %p299 = pneg %p108
        $region38: #{tpu_custom_call.1} parent=23 // pred_check_branch
          %301 = sbr.rel (%p299) target = $region40
        $region39: #{tpu_custom_call.1} parent=23 // pred_region
          %s303 = ssub.s32 64, 64
          %304 = vsyncadd %s277, %s303
          %s305 = smul.addr %s28, 64
          %s306 = scalar_lea.hbm %s2, %s305
          %s308 = sshll.u32 %s280, 4
          %s309 = int_to_ptr.vmem [resolvable:$true] %s308
          %311 = dma.vmem_to_hbm [thread:$0]  %s309, 64, %s306, %s277
        $region40: #{tpu_custom_call.1} parent=23 // pred_fallthru
          _
        // Predicated region
        $region41: #{tpu_custom_call.1} parent=23 // pred_check
          %p312 = pneg %p134
        $region42: #{tpu_custom_call.1} parent=23 // pred_check_branch
          %314 = sbr.rel (%p312) target = $region44
        $region43: #{tpu_custom_call.1} parent=23 // pred_region
          %s316 = ssub.s32 64, 64
          %317 = vsyncadd %s282, %s316
          %s318 = smul.addr %s28, 64
          %s319 = scalar_lea.hbm %s3, %s318
          %s321 = sshll.u32 %s285, 4
          %s322 = int_to_ptr.vmem [resolvable:$true] %s321
          %324 = dma.vmem_to_hbm [thread:$0]  %s322, 64, %s319, %s282
        $region44: #{tpu_custom_call.1} parent=23 // pred_fallthru
          _
      $region24: #{tpu_custom_call.1} parent=5 // pred_fallthru
        _
      %p325 = scmp.le.s32.totalorder 2, %s19
      // Predicated region
      $region45: #{tpu_custom_call.1} parent=5 // pred_check
        %p326 = pneg %p325
      $region46: #{tpu_custom_call.1} parent=5 // pred_check_branch
        %328 = sbr.rel (%p326) target = $region48
      $region47: #{tpu_custom_call.1} parent=5 // pred_region
        %s329 = ssub.s32 %s19, 2
        // Predicated region
        $region49: #{tpu_custom_call.1} parent=47 // pred_check
          %p330 = pneg %p88
        $region50: #{tpu_custom_call.1} parent=47 // pred_check_branch
          %332 = sbr.rel (%p330) target = $region52
        $region51: #{tpu_custom_call.1} parent=47 // pred_region
          %s333 = sand.u32 %s73, 1
          %s334 = scalar_lea.sflag [#allocation4], %s333
          %s335 = sand.u32 %s73, 1
          %s336 = smul.addr %s335, 4
          %s337 = scalar_lea.vmem [#allocation5], %s336
          %338 = dma.done %s334, 64
        $region52: #{tpu_custom_call.1} parent=47 // pred_fallthru
          _
        // Predicated region
        $region53: #{tpu_custom_call.1} parent=47 // pred_check
          %p339 = pneg %p114
        $region54: #{tpu_custom_call.1} parent=47 // pred_check_branch
          %341 = sbr.rel (%p339) target = $region56
        $region55: #{tpu_custom_call.1} parent=47 // pred_region
          %s342 = sand.u32 %s25, 1
          %s343 = scalar_lea.sflag [#allocation7], %s342
          %s344 = sand.u32 %s99, 1
          %s345 = smul.addr %s344, 4
          %s346 = scalar_lea.vmem [#allocation6], %s345
          %347 = dma.done %s343, 64
        $region56: #{tpu_custom_call.1} parent=47 // pred_fallthru
          _
        // Predicated region
        $region57: #{tpu_custom_call.1} parent=47 // pred_check
          %p348 = pneg %p140
        $region58: #{tpu_custom_call.1} parent=47 // pred_check_branch
          %350 = sbr.rel (%p348) target = $region60
        $region59: #{tpu_custom_call.1} parent=47 // pred_region
          %s351 = sand.u32 %s25, 1
          %s352 = scalar_lea.sflag [#allocation7], %s351
          %s353 = sand.u32 %s125, 1
          %s354 = smul.addr %s353, 4
          %s355 = scalar_lea.vmem [#allocation8], %s354
          %356 = dma.done %s352, 64
        $region60: #{tpu_custom_call.1} parent=47 // pred_fallthru
          _
      $region48: #{tpu_custom_call.1} parent=5 // pred_fallthru
        _
    $region6: #{tpu_custom_call.1} parent=1 // loop_footer
      %s23 = sadd.s32 1, %s19
    $region7: #{tpu_custom_call.1} parent=1 // loop_footer_branch
      %18 = sbr.rel target = $region3
    $region8: #{tpu_custom_call.1} parent=1 // loop_exit
      _
    %357 = vsyncpa [#allocation3], 1
    %s358 = scalar_lea.sflag [#allocation3], 1
    %359 = vsyncpa %s358, 1
    %360 = vsyncpa [#allocation4], 1
    %s361 = scalar_lea.sflag [#allocation4], 1
    %362 = vsyncpa %s361, 1
    %363 = vsyncpa [#allocation7], 1
    %s364 = scalar_lea.sflag [#allocation7], 1
    %365 = vsyncpa %s364, 1

</llo_original>
